<compile_context>
chip_gen: v6e
topology: v6e:2x2x1
jax: 0.10.0
libtpu: 0.0.40
codegen_flags: <defaults>
</compile_context>

<pallas_src>
import functools

import jax
import jax.numpy as jnp
from jax.experimental import pallas as pl
from jax.experimental.pallas import tpu as pltpu


def _round_up(x, m):
    return (x + m - 1) // m * m


def _cpd_kernel(zt_ref, w1a_ref, c1_ref, w2h_ref, vc2_ref, wlh_ref, vcl_ref,
                repl_ref, out_ref, wlp_scr, *, num_node, w_dim, row_strip):
    V = num_node

    zt = zt_ref[...]                     # (tn, d+1): z with time as last column
    t = zt[:, -1:]                       # (tn, 1)

    # ---- MLP stage (time embedding folded into weights/biases in the wrapper) ----
    # layer 1: time contribution is an extra K-row of w1a, so no broadcast here
    h1 = jnp.tanh(jnp.dot(zt, w1a_ref[...], preferred_element_type=jnp.float32)
                  + c1_ref[...])                                     # (tn, H1)
    # layer 2 / final projection: one broadcast-FMA each, t read once from zt
    h2 = jnp.tanh(jnp.dot(h1, w2h_ref[...], preferred_element_type=jnp.float32)
                  + t * vc2_ref[0:1, :] + vc2_ref[1:2, :])           # (tn, H2)
    wlp_scr[...] = jnp.tanh(
        jnp.dot(h2, wlh_ref[...], preferred_element_type=jnp.float32)
        + t * vcl_ref[0:1, :] + vcl_ref[1:2, :])                     # (tn, w_dim*V)

    rep_l = repl_ref[...]                # (V, V*V): rep_l[p, i*V+k] = (p == i)
    n_strips = out_ref.shape[0] // row_strip

    # ---- gram + sigmoid, per row strip so temporaries stay in registers ----
    @pl.loop(0, n_strips)
    def _(s):
        r0 = pl.multiple_of(s * row_strip, row_strip)
        wlp_s = wlp_scr[pl.ds(r0, row_strip), :]          # (RS, w_dim*V)

        def term(j):
            col = wlp_s[:, j * V:(j + 1) * V]             # (RS, V) = w_left[:, :, j]
            # left[n, i*V+k]  = col[n, i]   (single MXU dot per j)
            left = jnp.dot(col, rep_l, preferred_element_type=jnp.float32)
            # right[n, i*V+k] = col[n, k]   (lane tiling, no MXU)
            right = jnp.concatenate([col] * V, axis=1)
            return left * right

        acc = term(0)                                     # init with j=0, no zero-fill
        for j in range(1, w_dim):                         # w_dim is tiny -> static unroll
            acc = acc + term(j)

        out_ref[pl.ds(r0, row_strip), :] = jax.nn.sigmoid(acc).astype(out_ref.dtype)


def cpd_forward(z, time_points, params, *, num_node, w_dim, tile_n=None):
    """z: (N, d) f32; time_points: (N,) f32. Returns (N, num_node, num_node) f32."""
    N, d = z.shape
    wt, bt, w1, b1, w2, b2, wl = (params[k] for k in
                                  ("wt", "bt", "w1", "b1", "w2", "b2", "wl"))
    h1 = w1.shape[1]
    h2 = w2.shape[1]
    V = num_node
    f32 = jnp.float32

    # ---- tiling: >=2 grid steps for small/medium N (v7x megacore), 512 rows for big N
    if tile_n is None:
        tile_n = 512 if N > 1024 else max(8, _round_up((N + 1) // 2, 8))
    tile_n = _round_up(max(tile_n, 8), 8)
    n_pad = _round_up(N, tile_n)
    grid = (n_pad // tile_n,)

    # inner row strip: keep (RS, V*V) f32 temporaries around 64 KiB (vreg-friendly)
    rs_cap = max(8, (16384 // (V * V)) // 8 * 8)
    row_strip = min(64, rs_cap, tile_n)
    while tile_n % row_strip:
        row_strip -= 8
    row_strip = max(row_strip, 8)

    # ---- wrapper-side weight preparation (exact algebra, no approximation) ----
    wt_vec = wt.reshape(-1).astype(f32)                  # (d,)  torch weight (d,1)
    bt = bt.astype(f32)

    w1z, w1t = w1[:d].astype(f32), w1[d:].astype(f32)    # (d,h1), (d,h1)
    w2h, w2t = w2[:h1].astype(f32), w2[h1:].astype(f32)  # (h1,h2), (d,h2)

    # permute final-layer columns: new column m' = j*V + i holds old column i*w_dim + j
    mprime = jnp.arange(V * w_dim)
    old_idx = (mprime % V) * w_dim + (mprime // V)
    wl_perm = wl[:, old_idx].astype(f32)                 # (h2+d, w_dim*V)
    wlh, wlt = wl_perm[:h2], wl_perm[h2:]                # (h2, w_dim*V), (d, w_dim*V)

    # fold temb = t*wt_vec + bt into per-layer time vectors / biases
    v1 = (wt_vec @ w1t).reshape(1, h1)
    c1 = (bt @ w1t + b1.astype(f32)).reshape(1, h1)
    v2 = (wt_vec @ w2t).reshape(1, h2)
    c2 = (bt @ w2t + b2.astype(f32)).reshape(1, h2)
    vl = (wt_vec @ wlt).reshape(1, V * w_dim)
    cl = (bt @ wlt).reshape(1, V * w_dim)

    w1a = jnp.concatenate([w1z, v1], axis=0)             # (d+1, h1): t folded into layer 1
    vc2 = jnp.concatenate([v2, c2], axis=0)              # (2, h2)
    vcl = jnp.concatenate([vl, cl], axis=0)              # (2, w_dim*V)

    # constant 0/1 replication matrix for the "repeat-interleave" half of the outer product
    rep_l = jnp.repeat(jnp.eye(V, dtype=f32), V, axis=1)  # (V, V*V): [p, i*V+k] = (p==i)

    # append t as the last feature column of z; pad the sample axis to tile_n
    zt = jnp.concatenate(
        [z.astype(f32), time_points.reshape(N, 1).astype(f32)], axis=1)  # (N, d+1)
    if n_pad != N:
        zt = jnp.pad(zt, ((0, n_pad - N), (0, 0)))

    def full(arr):
        nd = arr.ndim
        return pl.BlockSpec(arr.shape, lambda i, _nd=nd: (0,) * _nd)

    kernel = functools.partial(_cpd_kernel, num_node=num_node, w_dim=w_dim,
                               row_strip=row_strip)

    out_flat = pl.pallas_call(
        kernel,
        out_shape=jax.ShapeDtypeStruct((n_pad, V * V), jnp.float32),
        grid_spec=pltpu.PrefetchScalarGridSpec(
            num_scalar_prefetch=0,
            grid=grid,
            in_specs=[
                pl.BlockSpec((tile_n, d + 1), lambda i: (i, 0)),   # z||t
                full(w1a), full(c1),
                full(w2h), full(vc2),
                full(wlh), full(vcl),
                full(rep_l),
            ],
            out_specs=pl.BlockSpec((tile_n, V * V), lambda i: (i, 0)),
            scratch_shapes=[pltpu.VMEM((tile_n, w_dim * V), jnp.float32)],
        ),
        compiler_params=pltpu.CompilerParams(
            dimension_semantics=("parallel",)),
    )(zt, w1a, c1, w2h, vc2, wlh, vcl, rep_l)

    return out_flat[:N].reshape(N, V, V)


def cpd_reference(z, time_points, params, *, num_node, w_dim):
    """Pure-JAX reference matching the PyTorch forward (undirected case)."""
    wt, bt, w1, b1, w2, b2, wl = (params[k] for k in
                                  ("wt", "bt", "w1", "b1", "w2", "b2", "wl"))
    temb = time_points[:, None] * wt.reshape(1, -1) + bt[None, :]
    x = jnp.concatenate([z, temb], axis=1)
    x = jnp.tanh(x @ w1 + b1)
    x = jnp.concatenate([x, temb], axis=1)
    x = jnp.tanh(x @ w2 + b2)
    x = jnp.concatenate([x, temb], axis=1)
    wleft = jnp.tanh(x @ wl).reshape(-1, num_node, w_dim)
    gram = jnp.einsum('nij,nkj->nik', wleft, wleft)
    return jax.nn.sigmoid(gram)


if __name__ == "__main__":
    # Small shapes consistent with the module's forward:
    #   d = latent_dim, output_layer = [32, 64], N = T * num_samples
    d = 8
    H1, H2 = 32, 64
    num_node = 16
    w_dim = 4
    T = 5
    num_samples = 4
    N = T * num_samples            # 20 (exercises remainder padding)

    key = jax.random.PRNGKey(0)
    keys = jax.random.split(key, 8)
    scale = 0.1
    params = {
        "wt": jax.random.normal(keys[0], (d, 1), jnp.float32) * scale,  # t_embedding weight (torch: (d,1))
        "bt": jax.random.normal(keys[1], (d,), jnp.float32) * scale,
        "w1": jax.random.normal(keys[2], (2 * d, H1), jnp.float32) * scale,
        "b1": jax.random.normal(keys[3], (H1,), jnp.float32) * scale,
        "w2": jax.random.normal(keys[4], (H1 + d, H2), jnp.float32) * scale,
        "b2": jax.random.normal(keys[5], (H2,), jnp.float32) * scale,
        "wl": jax.random.normal(keys[6], (H2 + d, num_node * w_dim), jnp.float32) * scale,
    }

    z = jax.random.normal(keys[7], (N, d), jnp.float32)
    # time_points = arange(T).repeat_interleave(num_samples)
    time_points = jnp.repeat(jnp.arange(T, dtype=jnp.float32), num_samples)

    ref = cpd_reference(z, time_points, params, num_node=num_node, w_dim=w_dim)

    # Default tiling (two grid steps here, 512-row tiles at large N).
    out = cpd_forward(z, time_points, params, num_node=num_node, w_dim=w_dim)
    out = jax.block_until_ready(out)
    assert out.shape == (N, num_node, num_node)
    assert jnp.allclose(out, ref, atol=1e-5, rtol=1e-5), "mismatch vs reference (default tile)"

    # Small explicit tile to also exercise a multi-step grid with padding.
    out2 = cpd_forward(z, time_points, params, num_node=num_node, w_dim=w_dim, tile_n=8)
    out2 = jax.block_until_ready(out2)
    assert jnp.allclose(out2, ref, atol=1e-5, rtol=1e-5), "mismatch vs reference (tile_n=8)"

    print("KERNEL_OK")
</pallas_src>

<mosaic_0001>
module attributes {stable_mosaic.version = 11 : i64} {
  func.func @_cpd_kernel(%arg0: i32, %arg1: memref<16x9xf32, #tpu.memory_space<vmem>>, %arg2: memref<9x32xf32, #tpu.memory_space<vmem>>, %arg3: memref<1x32xf32, #tpu.memory_space<vmem>>, %arg4: memref<32x64xf32, #tpu.memory_space<vmem>>, %arg5: memref<2x64xf32, #tpu.memory_space<vmem>>, %arg6: memref<64x64xf32, #tpu.memory_space<vmem>>, %arg7: memref<2x64xf32, #tpu.memory_space<vmem>>, %arg8: memref<16x256xf32, #tpu.memory_space<vmem>>, %arg9: memref<16x256xf32, #tpu.memory_space<vmem>>, %arg10: memref<16x64xf32, #tpu.memory_space<vmem>>) attributes {dimension_semantics = [#tpu.dimension_semantics<parallel>], iteration_bounds = array<i64: 2>, scalar_prefetch = 0 : i64, scratch_operands = 1 : i64, tpu.core_type = #tpu.core_type<tc>, window_params = [{transform_indices = @transform_0, window_bounds = array<i64: 16, 9>}, {pipeline_mode = #tpu.pipeline_mode<synchronous>, transform_indices = @transform_1, window_bounds = array<i64: 9, 32>}, {pipeline_mode = #tpu.pipeline_mode<synchronous>, transform_indices = @transform_2, window_bounds = array<i64: 1, 32>}, {pipeline_mode = #tpu.pipeline_mode<synchronous>, transform_indices = @transform_3, window_bounds = array<i64: 32, 64>}, {pipeline_mode = #tpu.pipeline_mode<synchronous>, transform_indices = @transform_4, window_bounds = array<i64: 2, 64>}, {pipeline_mode = #tpu.pipeline_mode<synchronous>, transform_indices = @transform_5, window_bounds = array<i64: 64, 64>}, {pipeline_mode = #tpu.pipeline_mode<synchronous>, transform_indices = @transform_6, window_bounds = array<i64: 2, 64>}, {pipeline_mode = #tpu.pipeline_mode<synchronous>, transform_indices = @transform_7, window_bounds = array<i64: 16, 256>}, {transform_indices = @transform_8, window_bounds = array<i64: 16, 256>}]} {
    %c0 = arith.constant 0 : index
    %c0_0 = arith.constant 0 : index
    %0 = vector.load %arg1[%c0, %c0_0] : memref<16x9xf32, #tpu.memory_space<vmem>>, vector<16x9xf32>
    %1 = vector.extract_strided_slice %0 {offsets = [0, 8], sizes = [16, 1], strides = [1, 1]} : vector<16x9xf32> to vector<16x1xf32>
    %c0_1 = arith.constant 0 : index
    %c0_2 = arith.constant 0 : index
    %2 = vector.load %arg2[%c0_1, %c0_2] : memref<9x32xf32, #tpu.memory_space<vmem>>, vector<9x32xf32>
    %cst = arith.constant dense<0.000000e+00> : vector<16x32xf32>
    %3 = tpu.matmul %0, %2, %cst {dimension_numbers = #tpu.dot_dimension_numbers<[1], [0], [0], [1], [0, 0, 1, 1], [], []>} : vector<16x9xf32>, vector<9x32xf32>, vector<16x32xf32> -> vector<16x32xf32>
    %c0_3 = arith.constant 0 : index
    %c0_4 = arith.constant 0 : index
    %4 = vector.load %arg3[%c0_3, %c0_4] : memref<1x32xf32, #tpu.memory_space<vmem>>, vector<1x32xf32>
    %5 = vector.broadcast %4 : vector<1x32xf32> to vector<16x32xf32>
    %6 = arith.addf %3, %5 : vector<16x32xf32>
    %7 = math.tanh %6 : vector<16x32xf32>
    %c0_5 = arith.constant 0 : index
    %c0_6 = arith.constant 0 : index
    %8 = vector.load %arg4[%c0_5, %c0_6] : memref<32x64xf32, #tpu.memory_space<vmem>>, vector<32x64xf32>
    %cst_7 = arith.constant dense<0.000000e+00> : vector<16x64xf32>
    %9 = tpu.matmul %7, %8, %cst_7 {dimension_numbers = #tpu.dot_dimension_numbers<[1], [0], [0], [1], [0, 0, 1, 1], [], []>} : vector<16x32xf32>, vector<32x64xf32>, vector<16x64xf32> -> vector<16x64xf32>
    %c0_8 = arith.constant 0 : index
    %c0_9 = arith.constant 0 : index
    %10 = vector.load %arg5[%c0_8, %c0_9] : memref<2x64xf32, #tpu.memory_space<vmem>>, vector<1x64xf32>
    %11 = vector.broadcast %1 : vector<16x1xf32> to vector<16x64xf32>
    %12 = vector.broadcast %10 : vector<1x64xf32> to vector<16x64xf32>
    %13 = arith.mulf %11, %12 : vector<16x64xf32>
    %14 = arith.addf %9, %13 : vector<16x64xf32>
    %c1 = arith.constant 1 : index
    %c0_10 = arith.constant 0 : index
    %15 = vector.load %arg5[%c1, %c0_10] : memref<2x64xf32, #tpu.memory_space<vmem>>, vector<1x64xf32>
    %16 = vector.broadcast %15 : vector<1x64xf32> to vector<16x64xf32>
    %17 = arith.addf %14, %16 : vector<16x64xf32>
    %18 = math.tanh %17 : vector<16x64xf32>
    %c0_11 = arith.constant 0 : index
    %c0_12 = arith.constant 0 : index
    %19 = vector.load %arg6[%c0_11, %c0_12] : memref<64x64xf32, #tpu.memory_space<vmem>>, vector<64x64xf32>
    %cst_13 = arith.constant dense<0.000000e+00> : vector<16x64xf32>
    %20 = tpu.matmul %18, %19, %cst_13 {dimension_numbers = #tpu.dot_dimension_numbers<[1], [0], [0], [1], [0, 0, 1, 1], [], []>} : vector<16x64xf32>, vector<64x64xf32>, vector<16x64xf32> -> vector<16x64xf32>
    %c0_14 = arith.constant 0 : index
    %c0_15 = arith.constant 0 : index
    %21 = vector.load %arg7[%c0_14, %c0_15] : memref<2x64xf32, #tpu.memory_space<vmem>>, vector<1x64xf32>
    %22 = vector.broadcast %1 : vector<16x1xf32> to vector<16x64xf32>
    %23 = vector.broadcast %21 : vector<1x64xf32> to vector<16x64xf32>
    %24 = arith.mulf %22, %23 : vector<16x64xf32>
    %25 = arith.addf %20, %24 : vector<16x64xf32>
    %c1_16 = arith.constant 1 : index
    %c0_17 = arith.constant 0 : index
    %26 = vector.load %arg7[%c1_16, %c0_17] : memref<2x64xf32, #tpu.memory_space<vmem>>, vector<1x64xf32>
    %27 = vector.broadcast %26 : vector<1x64xf32> to vector<16x64xf32>
    %28 = arith.addf %25, %27 : vector<16x64xf32>
    %29 = math.tanh %28 : vector<16x64xf32>
    %c0_18 = arith.constant 0 : index
    %c0_19 = arith.constant 0 : index
    %30 = vector.load %arg10[%c0_18, %c0_19] : memref<16x64xf32, #tpu.memory_space<vmem>>, vector<16x64xf32>
    tpu.vector_store %arg10[%c0_18, %c0_19], %29 {strides = array<i32>} : memref<16x64xf32, #tpu.memory_space<vmem>>, vector<16x64xf32>,
    %c0_20 = arith.constant 0 : index
    %c0_21 = arith.constant 0 : index
    %31 = vector.load %arg8[%c0_20, %c0_21] : memref<16x256xf32, #tpu.memory_space<vmem>>, vector<16x256xf32>
    %c0_i32 = arith.constant 0 : i32
    %c1_i32 = arith.constant 1 : i32
    %32 = arith.muli %c0_i32, %c1_i32 : i32
    %c0_i32_22 = arith.constant 0 : i32
    %33 = arith.addi %c0_i32_22, %32 : i32
    %c16_i32 = arith.constant 16 : i32
    %34 = arith.muli %33, %c16_i32 : i32
    %35 = tpu.assume_multiple %34, 16 : i32
    %36 = arith.index_cast %35 : i32 to index
    %c0_23 = arith.constant 0 : index
    %37 = vector.load %arg10[%36, %c0_23] : memref<16x64xf32, #tpu.memory_space<vmem>>, vector<16x64xf32>
    %38 = vector.extract_strided_slice %37 {offsets = [0, 0], sizes = [16, 16], strides = [1, 1]} : vector<16x64xf32> to vector<16x16xf32>
    %cst_24 = arith.constant dense<0.000000e+00> : vector<16x256xf32>
    %39 = tpu.matmul %38, %31, %cst_24 {dimension_numbers = #tpu.dot_dimension_numbers<[1], [0], [0], [1], [0, 0, 1, 1], [], []>} : vector<16x16xf32>, vector<16x256xf32>, vector<16x256xf32> -> vector<16x256xf32>
    %40 = tpu.concatenate %38, %38, %38, %38, %38, %38, %38, %38, %38, %38, %38, %38, %38, %38, %38, %38 in 1 : vector<16x16xf32>, vector<16x16xf32>, vector<16x16xf32>, vector<16x16xf32>, vector<16x16xf32>, vector<16x16xf32>, vector<16x16xf32>, vector<16x16xf32>, vector<16x16xf32>, vector<16x16xf32>, vector<16x16xf32>, vector<16x16xf32>, vector<16x16xf32>, vector<16x16xf32>, vector<16x16xf32>, vector<16x16xf32> -> vector<16x256xf32>
    %41 = arith.mulf %39, %40 : vector<16x256xf32>
    %42 = vector.extract_strided_slice %37 {offsets = [0, 16], sizes = [16, 16], strides = [1, 1]} : vector<16x64xf32> to vector<16x16xf32>
    %cst_25 = arith.constant dense<0.000000e+00> : vector<16x256xf32>
    %43 = tpu.matmul %42, %31, %cst_25 {dimension_numbers = #tpu.dot_dimension_numbers<[1], [0], [0], [1], [0, 0, 1, 1], [], []>} : vector<16x16xf32>, vector<16x256xf32>, vector<16x256xf32> -> vector<16x256xf32>
    %44 = tpu.concatenate %42, %42, %42, %42, %42, %42, %42, %42, %42, %42, %42, %42, %42, %42, %42, %42 in 1 : vector<16x16xf32>, vector<16x16xf32>, vector<16x16xf32>, vector<16x16xf32>, vector<16x16xf32>, vector<16x16xf32>, vector<16x16xf32>, vector<16x16xf32>, vector<16x16xf32>, vector<16x16xf32>, vector<16x16xf32>, vector<16x16xf32>, vector<16x16xf32>, vector<16x16xf32>, vector<16x16xf32>, vector<16x16xf32> -> vector<16x256xf32>
    %45 = arith.mulf %43, %44 : vector<16x256xf32>
    %46 = arith.addf %41, %45 : vector<16x256xf32>
    %47 = vector.extract_strided_slice %37 {offsets = [0, 32], sizes = [16, 16], strides = [1, 1]} : vector<16x64xf32> to vector<16x16xf32>
    %cst_26 = arith.constant dense<0.000000e+00> : vector<16x256xf32>
    %48 = tpu.matmul %47, %31, %cst_26 {dimension_numbers = #tpu.dot_dimension_numbers<[1], [0], [0], [1], [0, 0, 1, 1], [], []>} : vector<16x16xf32>, vector<16x256xf32>, vector<16x256xf32> -> vector<16x256xf32>
    %49 = tpu.concatenate %47, %47, %47, %47, %47, %47, %47, %47, %47, %47, %47, %47, %47, %47, %47, %47 in 1 : vector<16x16xf32>, vector<16x16xf32>, vector<16x16xf32>, vector<16x16xf32>, vector<16x16xf32>, vector<16x16xf32>, vector<16x16xf32>, vector<16x16xf32>, vector<16x16xf32>, vector<16x16xf32>, vector<16x16xf32>, vector<16x16xf32>, vector<16x16xf32>, vector<16x16xf32>, vector<16x16xf32>, vector<16x16xf32> -> vector<16x256xf32>
    %50 = arith.mulf %48, %49 : vector<16x256xf32>
    %51 = arith.addf %46, %50 : vector<16x256xf32>
    %52 = vector.extract_strided_slice %37 {offsets = [0, 48], sizes = [16, 16], strides = [1, 1]} : vector<16x64xf32> to vector<16x16xf32>
    %cst_27 = arith.constant dense<0.000000e+00> : vector<16x256xf32>
    %53 = tpu.matmul %52, %31, %cst_27 {dimension_numbers = #tpu.dot_dimension_numbers<[1], [0], [0], [1], [0, 0, 1, 1], [], []>} : vector<16x16xf32>, vector<16x256xf32>, vector<16x256xf32> -> vector<16x256xf32>
    %54 = tpu.concatenate %52, %52, %52, %52, %52, %52, %52, %52, %52, %52, %52, %52, %52, %52, %52, %52 in 1 : vector<16x16xf32>, vector<16x16xf32>, vector<16x16xf32>, vector<16x16xf32>, vector<16x16xf32>, vector<16x16xf32>, vector<16x16xf32>, vector<16x16xf32>, vector<16x16xf32>, vector<16x16xf32>, vector<16x16xf32>, vector<16x16xf32>, vector<16x16xf32>, vector<16x16xf32>, vector<16x16xf32>, vector<16x16xf32> -> vector<16x256xf32>
    %55 = arith.mulf %53, %54 : vector<16x256xf32>
    %56 = arith.addf %51, %55 : vector<16x256xf32>
    %57 = arith.negf %56 : vector<16x256xf32>
    %58 = math.exp %57 : vector<16x256xf32>
    %cst_28 = arith.constant 1.000000e+00 : f32
    %59 = vector.broadcast %cst_28 : f32 to vector<16x256xf32>
    %60 = arith.addf %59, %58 : vector<16x256xf32>
    %61 = arith.divf %59, %60 : vector<16x256xf32>
    %62 = arith.index_cast %35 : i32 to index
    %c0_29 = arith.constant 0 : index
    %63 = vector.load %arg9[%62, %c0_29] : memref<16x256xf32, #tpu.memory_space<vmem>>, vector<16x256xf32>
    tpu.vector_store %arg9[%62, %c0_29], %61 {strides = array<i32>} : memref<16x256xf32, #tpu.memory_space<vmem>>, vector<16x256xf32>,
    %c1_i32_30 = arith.constant 1 : i32
    return
  }
  func.func @transform_0(%arg0: i32) -> (i32, i32) {
    %c0_i32 = arith.constant 0 : i32
    %c0_i32_0 = arith.constant 0 : i32
    return %arg0, %c0_i32 : i32, i32
  }
  func.func @transform_1(%arg0: i32) -> (i32, i32) {
    %c0_i32 = arith.constant 0 : i32
    %c0_i32_0 = arith.constant 0 : i32
    %c0_i32_1 = arith.constant 0 : i32
    return %c0_i32, %c0_i32_0 : i32, i32
  }
  func.func @transform_2(%arg0: i32) -> (i32, i32) {
    %c0_i32 = arith.constant 0 : i32
    %c0_i32_0 = arith.constant 0 : i32
    %c0_i32_1 = arith.constant 0 : i32
    return %c0_i32, %c0_i32_0 : i32, i32
  }
  func.func @transform_3(%arg0: i32) -> (i32, i32) {
    %c0_i32 = arith.constant 0 : i32
    %c0_i32_0 = arith.constant 0 : i32
    %c0_i32_1 = arith.constant 0 : i32
    return %c0_i32, %c0_i32_0 : i32, i32
  }
  func.func @transform_4(%arg0: i32) -> (i32, i32) {
    %c0_i32 = arith.constant 0 : i32
    %c0_i32_0 = arith.constant 0 : i32
    %c0_i32_1 = arith.constant 0 : i32
    return %c0_i32, %c0_i32_0 : i32, i32
  }
  func.func @transform_5(%arg0: i32) -> (i32, i32) {
    %c0_i32 = arith.constant 0 : i32
    %c0_i32_0 = arith.constant 0 : i32
    %c0_i32_1 = arith.constant 0 : i32
    return %c0_i32, %c0_i32_0 : i32, i32
  }
  func.func @transform_6(%arg0: i32) -> (i32, i32) {
    %c0_i32 = arith.constant 0 : i32
    %c0_i32_0 = arith.constant 0 : i32
    %c0_i32_1 = arith.constant 0 : i32
    return %c0_i32, %c0_i32_0 : i32, i32
  }
  func.func @transform_7(%arg0: i32) -> (i32, i32) {
    %c0_i32 = arith.constant 0 : i32
    %c0_i32_0 = arith.constant 0 : i32
    %c0_i32_1 = arith.constant 0 : i32
    return %c0_i32, %c0_i32_0 : i32, i32
  }
  func.func @transform_8(%arg0: i32) -> (i32, i32) {
    %c0_i32 = arith.constant 0 : i32
    %c0_i32_0 = arith.constant 0 : i32
    return %arg0, %c0_i32 : i32, i32
  }
}

</mosaic_0001>

<llo_original>
// kernel: tpu_custom_call.1
$region0: #{tpu_custom_call.1}
  #allocation0 [shape = 'u32[]', space=smem, size = 0x4, offset = 0x4, fixed_abs, tag = 'smem constant byte address 0x4 - core index']
  #allocation1 [shape = 'u32[144,128]{1,0:T(1,128)}', space=vmem, size = 0x12000, scoped, tag = 'internal scratch']
  #allocation2 [shape = 'f32[16,64]{1,0:T(8,128)}', space=vmem, size = 0x2000, scoped, tag = 'scratch operand']
  %s0 = inlined_call_operand.vmem [shape: f32[32,9], index: 0, kind: input, shape index: {}]
  %s1 = inlined_call_operand.vmem [shape: f32[9,32], index: 1, kind: input, shape index: {}]
  %s2 = inlined_call_operand.vmem [shape: f32[1,32], index: 2, kind: input, shape index: {}]
  %s3 = inlined_call_operand.vmem [shape: f32[32,64], index: 3, kind: input, shape index: {}]
  %s4 = inlined_call_operand.vmem [shape: f32[2,64], index: 4, kind: input, shape index: {}]
  %s5 = inlined_call_operand.hbm [shape: f32[64,64], index: 5, kind: input, shape index: {}]
  %s6 = inlined_call_operand.vmem [shape: f32[2,64], index: 6, kind: input, shape index: {}]
  %s7 = inlined_call_operand.hbm [shape: f32[16,256], index: 7, kind: input, shape index: {}]
  %s8 = inlined_call_operand.hbm [shape: f32[32,256], index: 8, kind: output, shape index: {}]
  %s9 = sld [smem:[#allocation0]]
  $region73: #{tpu_custom_call.1} parent=0
    _
  %s11 = ssub.s32 1, %s9
  %s12 = scalar_select 0, %s11, %s9
  $region1: #{tpu_custom_call.1} parent=0
    #allocation3 [shape = 'u8[32768]{0}', space=vmem, size = 0x8000, scoped, tag = 'input window, operand 5, single buffered']
    #allocation4 [shape = 's32[2]{0}', space=sflag, size = 0x8, scoped, tag = 'scoped memory for tpu_custom_call.1']
    #allocation5 [shape = 's32[2]{0}', space=sflag, size = 0x8, scoped, tag = 'scoped memory for tpu_custom_call.1']
    #allocation6 [shape = 'u8[16384]{0}', space=vmem, size = 0x4000, scoped, tag = 'input window, operand 7, single buffered']
    #allocation7 [shape = 's32[1]{0}', space=sflag, size = 0x4, scoped, tag = 'scoped memory for tpu_custom_call.1']
    #allocation8 [shape = 'u8[32768]{0}', space=vmem, size = 0x8000, scoped, tag = 'output window, operand 0']
    %13 = vsyncpa [#allocation4], 0
    %14 = vsyncpa [#allocation7], 0
    %15 = vsyncpa [#allocation5], 0
    %s16 = scalar_lea.sflag [#allocation5], 1
    %17 = vsyncpa %s16, 0
    loop: start=0, step=1, limit=4
    $region2: #{tpu_custom_call.1} parent=1 // loop_pre_header
      _
    $region3: #{tpu_custom_call.1} parent=1 // loop_header
      %s19 = sphi 0, %s23
      %p20 = scmp.ge.s32.totalorder %s19, 4
      %s29 = sphi 0, %s31
      %s32 = sphi 0, %s29
      %s33 = sphi 0, %s32
      %s49 = sphi 0, %s33
      %s53 = sphi 0, %s53
      %s55 = sphi 0, %s53
      %s56 = sphi 0, %s55
      %s70 = sphi 0, %s56
      %s74 = sphi 0, %s74
      %s76 = sphi 0, %s74
      %s77 = sphi 0, %s76
      %s91 = sphi 0, %s77
      %s95 = sphi 0, %s95
      %s97 = sphi 0, %s95
      %s98 = sphi 0, %s97
      %s112 = sphi 0, %s98
      %s116 = sphi 0, %s116
      %s118 = sphi 0, %s116
      %s119 = sphi 0, %s118
      %s133 = sphi 0, %s119
      %s137 = sphi 0, %s137
      %s139 = sphi 0, %s137
      %s140 = sphi 0, %s139
      %s154 = sphi 0, %s140
      %s158 = sphi 0, %s158
      %s160 = sphi 0, %s158
      %s161 = sphi 0, %s160
      %s175 = sphi 0, %s161
      %s179 = sphi 0, %s179
      %s181 = sphi 0, %s179
      %s182 = sphi 0, %s181
      %s196 = sphi 0, %s182
      %s202 = sphi 0, %s204
      %s205 = sphi 0, %s202
      %s206 = sphi 0, %s205
      %s222 = sphi 0, %s206
    $region4: #{tpu_custom_call.1} parent=1 // loop_header_branch
      %22 = sbr.rel (%p20) target = $region8
    $region5: #{tpu_custom_call.1} parent=1 // loop_body
      %s24 = ssub.s32 %s19, 1
      %s25 = ssub.s32 %s19, 2
      %s26 = sadd.s32 %s19, 1
      %s27 = ssub.s32 %s19, %s26
      %p28 = scmp.eq.s32.totalorder %s27, 0
      %s30 = sadd.s32 %s29, 1
      %s31 = scalar_select %p28, %s29, %s30
      %p34 = pneg %p28
      %p35 = scmp.eq.s32.totalorder %s19, 1
      %p36 = por %p34, %p35
      %p37 = scmp.ne.s32.totalorder %s29, %s32
      %p38 = scmp.eq.s32.totalorder %s19, 0
      %p39 = por %p37, %p38
      %p40 = scmp.ne.s32.totalorder %s29, %s32
      %p41 = scmp.eq.s32.totalorder %s24, 1
      %p42 = por %p40, %p41
      %p43 = scmp.ne.s32.totalorder %s32, %s33
      %p44 = scmp.eq.s32.totalorder %s24, 0
      %p45 = por %p43, %p44
      %p46 = scmp.ne.s32.totalorder %s32, %s33
      %p47 = scmp.eq.s32.totalorder %s25, 1
      %p48 = por %p46, %p47
      %p50 = scmp.ne.s32.totalorder %s33, %s49
      %p51 = scmp.eq.s32.totalorder %s25, 0
      %p52 = por %p50, %p51
      %s54 = sadd.s32 %s53, 1
      %p57 = scmp.eq.s32.totalorder %s19, 1
      %p58 = scmp.ne.s32.totalorder %s53, %s55
      %p59 = scmp.eq.s32.totalorder %s19, 0
      %p60 = por %p58, %p59
      %p61 = scmp.ne.s32.totalorder %s53, %s55
      %p62 = scmp.eq.s32.totalorder %s24, 1
      %p63 = por %p61, %p62
      %p64 = scmp.ne.s32.totalorder %s55, %s56
      %p65 = scmp.eq.s32.totalorder %s24, 0
      %p66 = por %p64, %p65
      %p67 = scmp.ne.s32.totalorder %s55, %s56
      %p68 = scmp.eq.s32.totalorder %s25, 1
      %p69 = por %p67, %p68
      %p71 = scmp.ne.s32.totalorder %s56, %s70
      %p72 = scmp.eq.s32.totalorder %s25, 0
      %p73 = por %p71, %p72
      %s75 = sadd.s32 %s74, 1
      %p78 = scmp.eq.s32.totalorder %s19, 1
      %p79 = scmp.ne.s32.totalorder %s74, %s76
      %p80 = scmp.eq.s32.totalorder %s19, 0
      %p81 = por %p79, %p80
      %p82 = scmp.ne.s32.totalorder %s74, %s76
      %p83 = scmp.eq.s32.totalorder %s24, 1
      %p84 = por %p82, %p83
      %p85 = scmp.ne.s32.totalorder %s76, %s77
      %p86 = scmp.eq.s32.totalorder %s24, 0
      %p87 = por %p85, %p86
      %p88 = scmp.ne.s32.totalorder %s76, %s77
      %p89 = scmp.eq.s32.totalorder %s25, 1
      %p90 = por %p88, %p89
      %p92 = scmp.ne.s32.totalorder %s77, %s91
      %p93 = scmp.eq.s32.totalorder %s25, 0
      %p94 = por %p92, %p93
      %s96 = sadd.s32 %s95, 1
      %p99 = scmp.eq.s32.totalorder %s19, 1
      %p100 = scmp.ne.s32.totalorder %s95, %s97
      %p101 = scmp.eq.s32.totalorder %s19, 0
      %p102 = por %p100, %p101
      %p103 = scmp.ne.s32.totalorder %s95, %s97
      %p104 = scmp.eq.s32.totalorder %s24, 1
      %p105 = por %p103, %p104
      %p106 = scmp.ne.s32.totalorder %s97, %s98
      %p107 = scmp.eq.s32.totalorder %s24, 0
      %p108 = por %p106, %p107
      %p109 = scmp.ne.s32.totalorder %s97, %s98
      %p110 = scmp.eq.s32.totalorder %s25, 1
      %p111 = por %p109, %p110
      %p113 = scmp.ne.s32.totalorder %s98, %s112
      %p114 = scmp.eq.s32.totalorder %s25, 0
      %p115 = por %p113, %p114
      %s117 = sadd.s32 %s116, 1
      %p120 = scmp.eq.s32.totalorder %s19, 1
      %p121 = scmp.ne.s32.totalorder %s116, %s118
      %p122 = scmp.eq.s32.totalorder %s19, 0
      %p123 = por %p121, %p122
      %p124 = scmp.ne.s32.totalorder %s116, %s118
      %p125 = scmp.eq.s32.totalorder %s24, 1
      %p126 = por %p124, %p125
      %p127 = scmp.ne.s32.totalorder %s118, %s119
      %p128 = scmp.eq.s32.totalorder %s24, 0
      %p129 = por %p127, %p128
      %p130 = scmp.ne.s32.totalorder %s118, %s119
      %p131 = scmp.eq.s32.totalorder %s25, 1
      %p132 = por %p130, %p131
      %p134 = scmp.ne.s32.totalorder %s119, %s133
      %p135 = scmp.eq.s32.totalorder %s25, 0
      %p136 = por %p134, %p135
      %s138 = sadd.s32 %s137, 1
      %p141 = scmp.eq.s32.totalorder %s19, 1
      %p142 = scmp.ne.s32.totalorder %s137, %s139
      %p143 = scmp.eq.s32.totalorder %s19, 0
      %p144 = por %p142, %p143
      %p145 = scmp.ne.s32.totalorder %s137, %s139
      %p146 = scmp.eq.s32.totalorder %s24, 1
      %p147 = por %p145, %p146
      %p148 = scmp.ne.s32.totalorder %s139, %s140
      %p149 = scmp.eq.s32.totalorder %s24, 0
      %p150 = por %p148, %p149
      %p151 = scmp.ne.s32.totalorder %s139, %s140
      %p152 = scmp.eq.s32.totalorder %s25, 1
      %p153 = por %p151, %p152
      %p155 = scmp.ne.s32.totalorder %s140, %s154
      %p156 = scmp.eq.s32.totalorder %s25, 0
      %p157 = por %p155, %p156
      %s159 = sadd.s32 %s158, 1
      %p162 = scmp.eq.s32.totalorder %s19, 1
      %p163 = scmp.ne.s32.totalorder %s158, %s160
      %p164 = scmp.eq.s32.totalorder %s19, 0
      %p165 = por %p163, %p164
      %p166 = scmp.ne.s32.totalorder %s158, %s160
      %p167 = scmp.eq.s32.totalorder %s24, 1
      %p168 = por %p166, %p167
      %p169 = scmp.ne.s32.totalorder %s160, %s161
      %p170 = scmp.eq.s32.totalorder %s24, 0
      %p171 = por %p169, %p170
      %p172 = scmp.ne.s32.totalorder %s160, %s161
      %p173 = scmp.eq.s32.totalorder %s25, 1
      %p174 = por %p172, %p173
      %p176 = scmp.ne.s32.totalorder %s161, %s175
      %p177 = scmp.eq.s32.totalorder %s25, 0
      %p178 = por %p176, %p177
      %s180 = sadd.s32 %s179, 1
      %p183 = scmp.eq.s32.totalorder %s19, 1
      %p184 = scmp.ne.s32.totalorder %s179, %s181
      %p185 = scmp.eq.s32.totalorder %s19, 0
      %p186 = por %p184, %p185
      %p187 = scmp.ne.s32.totalorder %s179, %s181
      %p188 = scmp.eq.s32.totalorder %s24, 1
      %p189 = por %p187, %p188
      %p190 = scmp.ne.s32.totalorder %s181, %s182
      %p191 = scmp.eq.s32.totalorder %s24, 0
      %p192 = por %p190, %p191
      %p193 = scmp.ne.s32.totalorder %s181, %s182
      %p194 = scmp.eq.s32.totalorder %s25, 1
      %p195 = por %p193, %p194
      %p197 = scmp.ne.s32.totalorder %s182, %s196
      %p198 = scmp.eq.s32.totalorder %s25, 0
      %p199 = por %p197, %p198
      %s200 = ssub.s32 %s19, %s26
      %p201 = scmp.eq.s32.totalorder %s200, 0
      %s203 = sadd.s32 %s202, 1
      %s204 = scalar_select %p201, %s202, %s203
      %p207 = pneg %p201
      %p208 = scmp.eq.s32.totalorder %s19, 1
      %p209 = por %p207, %p208
      %p210 = scmp.ne.s32.totalorder %s202, %s205
      %p211 = scmp.eq.s32.totalorder %s19, 0
      %p212 = por %p210, %p211
      %p213 = scmp.ne.s32.totalorder %s202, %s205
      %p214 = scmp.eq.s32.totalorder %s24, 1
      %p215 = por %p213, %p214
      %p216 = scmp.ne.s32.totalorder %s205, %s206
      %p217 = scmp.eq.s32.totalorder %s24, 0
      %p218 = por %p216, %p217
      %p219 = scmp.ne.s32.totalorder %s205, %s206
      %p220 = scmp.eq.s32.totalorder %s25, 1
      %p221 = por %p219, %p220
      %p223 = scmp.ne.s32.totalorder %s206, %s222
      %p224 = scmp.eq.s32.totalorder %s25, 0
      %p225 = por %p223, %p224
      %p226 = scmp.le.s32.totalorder 1, %s19
      %p227 = scmp.lt.s32.totalorder %s19, 3
      %p228 = pnand %p226, %p227
      %p229 = pneg %p228
      // Predicated region
      $region9: #{tpu_custom_call.1} parent=5 // pred_check
        _
      $region10: #{tpu_custom_call.1} parent=5 // pred_check_branch
        %231 = sbr.rel (%p228) target = $region12
      $region11: #{tpu_custom_call.1} parent=5 // pred_region
        %s232 = ssub.s32 %s19, 1
        // Predicated region
        $region13: #{tpu_custom_call.1} parent=11 // pred_check
          %p233 = pneg %p66
        $region14: #{tpu_custom_call.1} parent=11 // pred_check_branch
          %235 = sbr.rel (%p233) target = $region16
        $region15: #{tpu_custom_call.1} parent=11 // pred_region
          _
        $region16: #{tpu_custom_call.1} parent=11 // pred_fallthru
          _
        // Predicated region
        $region17: #{tpu_custom_call.1} parent=11 // pred_check
          %p236 = pneg %p87
        $region18: #{tpu_custom_call.1} parent=11 // pred_check_branch
          %238 = sbr.rel (%p236) target = $region20
        $region19: #{tpu_custom_call.1} parent=11 // pred_region
          _
        $region20: #{tpu_custom_call.1} parent=11 // pred_fallthru
          _
        // Predicated region
        $region21: #{tpu_custom_call.1} parent=11 // pred_check
          %p239 = pneg %p108
        $region22: #{tpu_custom_call.1} parent=11 // pred_check_branch
          %241 = sbr.rel (%p239) target = $region24
        $region23: #{tpu_custom_call.1} parent=11 // pred_region
          _
        $region24: #{tpu_custom_call.1} parent=11 // pred_fallthru
          _
        // Predicated region
        $region25: #{tpu_custom_call.1} parent=11 // pred_check
          %p242 = pneg %p129
        $region26: #{tpu_custom_call.1} parent=11 // pred_check_branch
          %244 = sbr.rel (%p242) target = $region28
        $region27: #{tpu_custom_call.1} parent=11 // pred_region
          _
        $region28: #{tpu_custom_call.1} parent=11 // pred_fallthru
          _
        // Predicated region
        $region29: #{tpu_custom_call.1} parent=11 // pred_check
          %p245 = pneg %p150
        $region30: #{tpu_custom_call.1} parent=11 // pred_check_branch
          %247 = sbr.rel (%p245) target = $region32
        $region31: #{tpu_custom_call.1} parent=11 // pred_region
          %s249 = ssub.s32 1024, 1024
          %250 = vsyncadd [#allocation4], %s249
          %s251 = sshll.u32 [#allocation3], 4
          %s252 = int_to_ptr.vmem [resolvable:$true] %s251
          %257 = dma.hbm_to_vmem [thread:$0]  %s5, 1024, %s252, [#allocation4], 128, 128, 8
        $region32: #{tpu_custom_call.1} parent=11 // pred_fallthru
          _
        // Predicated region
        $region33: #{tpu_custom_call.1} parent=11 // pred_check
          %p258 = pneg %p171
        $region34: #{tpu_custom_call.1} parent=11 // pred_check_branch
          %260 = sbr.rel (%p258) target = $region36
        $region35: #{tpu_custom_call.1} parent=11 // pred_region
          _
        $region36: #{tpu_custom_call.1} parent=11 // pred_fallthru
          _
        // Predicated region
        $region37: #{tpu_custom_call.1} parent=11 // pred_check
          %p261 = pneg %p192
        $region38: #{tpu_custom_call.1} parent=11 // pred_check_branch
          %263 = sbr.rel (%p261) target = $region40
        $region39: #{tpu_custom_call.1} parent=11 // pred_region
          %s265 = ssub.s32 512, 512
          %266 = vsyncadd [#allocation7], %s265
          %s267 = sshll.u32 [#allocation6], 4
          %s268 = int_to_ptr.vmem [resolvable:$true] %s267
          %273 = dma.hbm_to_vmem [thread:$0]  %s7, 512, %s268, [#allocation7], 256, 256, 16
        $region40: #{tpu_custom_call.1} parent=11 // pred_fallthru
          _
      $region12: #{tpu_custom_call.1} parent=5 // pred_fallthru
        _
      %p274 = scmp.lt.s32.totalorder %s19, 2
      // Predicated region
      $region41: #{tpu_custom_call.1} parent=5 // pred_check
        %p275 = pneg %p274
      $region42: #{tpu_custom_call.1} parent=5 // pred_check_branch
        %277 = sbr.rel (%p275) target = $region44
      $region43: #{tpu_custom_call.1} parent=5 // pred_region
        // Predicated region
        $region45: #{tpu_custom_call.1} parent=43 // pred_check
          %p278 = pneg %p39
        $region46: #{tpu_custom_call.1} parent=43 // pred_check_branch
          %280 = sbr.rel (%p278) target = $region48
        $region47: #{tpu_custom_call.1} parent=43 // pred_region
          %s281 = smul.u32 2, %s19
          %p282 = scmp.lt.s32.totalorder %s281, 3
          %s283 = scalar_select %p282, %s281, 3
          %s284 = smul.addr %s283, 8
          %s285 = scalar_lea.vmem %s0, %s284
          %s286 = smul.u32 2, %s19
        $region48: #{tpu_custom_call.1} parent=43 // pred_fallthru
          _
      $region44: #{tpu_custom_call.1} parent=5 // pred_fallthru
        _
      %p287 = scmp.le.s32.totalorder 1, %s19
      %p288 = scmp.lt.s32.totalorder %s19, 3
      %p289 = pnand %p287, %p288
      %p290 = pneg %p289
      // Predicated region
      $region49: #{tpu_custom_call.1} parent=5 // pred_check
        _
      $region50: #{tpu_custom_call.1} parent=5 // pred_check_branch
        %292 = sbr.rel (%p289) target = $region52
      $region51: #{tpu_custom_call.1} parent=5 // pred_region
        %s293 = ssub.s32 %s19, 1
        // Predicated region
        $region53: #{tpu_custom_call.1} parent=51 // pred_check
          %p294 = pneg %p150
        $region54: #{tpu_custom_call.1} parent=51 // pred_check_branch
          %296 = sbr.rel (%p294) target = $region56
        $region55: #{tpu_custom_call.1} parent=51 // pred_region
          %297 = dma.done [#allocation4], 1024
        $region56: #{tpu_custom_call.1} parent=51 // pred_fallthru
          _
        // Predicated region
        $region57: #{tpu_custom_call.1} parent=51 // pred_check
          %p298 = pneg %p192
        $region58: #{tpu_custom_call.1} parent=51 // pred_check_branch
          %300 = sbr.rel (%p298) target = $region60
        $region59: #{tpu_custom_call.1} parent=51 // pred_region
          %301 = dma.done [#allocation7], 512
        $region60: #{tpu_custom_call.1} parent=51 // pred_fallthru
          _
        %s302 = smul.u32 2, %s24
        %p303 = scmp.lt.s32.totalorder %s302, 3
        %s304 = scalar_select %p303, %s302, 3
        %s305 = smul.addr %s304, 8
        %s306 = scalar_lea.vmem %s0, %s305
        %p307 = pneg %p45
        %p308 = pneg %p42
        %p309 = pneg %p66
        %p310 = pneg %p63
        %p311 = pneg %p87
        %p312 = pneg %p84
        %p313 = pneg %p108
        %p314 = pneg %p105
        %p315 = pneg %p129
        %p316 = pneg %p126
        %p317 = pneg %p150
        %p318 = pneg %p147
        %p319 = pneg %p171
        %p320 = pneg %p168
        %p321 = pneg %p192
        %p322 = pneg %p189
        %p323 = pneg %p218
        %p324 = pneg %p215
        %s325 = sand.u32 %s205, 1
        %s326 = scalar_lea.sflag [#allocation5], %s325
        %s327 = sand.u32 %s205, 1
        %s328 = smul.addr %s327, 32
        %s329 = scalar_lea.vmem [#allocation8], %s328
        %s330 = smul.u32 2, %s24
        %p331 = scmp.lt.s32.totalorder %s330, 3
        %s332 = scalar_select %p331, %s330, 3
        %s333 = smul.addr %s332, 8
        %s334 = scalar_lea.vmem %s0, %s333
        %s335 = smul.u32 2, %s24
        %s336 = smul.u32 2, %s24
        %v337 = vld [vmem:[%s334] sm:$0xff]
        %v338 = vld [vmem:[%s334 + $0x8] sm:$0xff]
        %v339 = vld [vmem:[%s1] sm:$0xff]
        %v340 = vld [vmem:[%s1 + $0x8] sm:$0x1]
        %v341 = vld [vmem:[%s2] sm:$0x1]
        %v343 = vlaneseq
        %v344 = vshrl.u32 %v343, 7
        %v345 = vsub.s32 0, %v344
        %v346 = vrot.slane %v341, %v345
        %vm348 = vcmask 72704
        %v350 = vsel %vm348, %v337, 0
        %v353 = vsel %vm348, %v338, 0
        %vm355 = vcmask 1040384
        %v357 = vsel %vm355, %v340, 0
        %359 = vmatprep.subr.mxu0 0.0
        %360 = vmatpush1.msra.mxu0 0.0
        %361 = vmatprep.subr.mxu0 0.0
        %362 = vmatpush1.msra.mxu0 0.0
        %363 = vmatprep.subr.mxu0 0.0
        %364 = vmatpush1.msra.mxu0 0.0
        %365 = vmatprep.subr.mxu0 0.0
        %366 = vmatpush1.msra.mxu0 0.0
        %367 = vmatprep.subr.mxu0 0.0
        %368 = vmatpush1.msra.mxu0 0.0
        %369 = vmatprep.subr.mxu0 0.0
        %370 = vmatpush1.msra.mxu0 0.0
        %371 = vmatprep.subr.mxu0 0.0
        %372 = vmatpush1.msra.mxu0 0.0
        %373 = vmatprep.subr.mxu0 0.0
        %374 = vmatpush1.msra.mxu0 0.0
        %375 = vmatprep.subr.mxu0 0.0
        %376 = vmatpush1.msra.mxu0 0.0
        %377 = vmatprep.subr.mxu0 0.0
        %378 = vmatpush1.msra.mxu0 0.0
        %379 = vmatprep.subr.mxu0 0.0
        %380 = vmatpush1.msra.mxu0 0.0
        %381 = vmatprep.subr.mxu0 0.0
        %382 = vmatpush1.msra.mxu0 0.0
        %383 = vmatprep.subr.mxu0 0.0
        %384 = vmatpush1.msra.mxu0 0.0
        %385 = vmatprep.subr.mxu0 0.0
        %386 = vmatpush1.msra.mxu0 0.0
        %387 = vmatprep.subr.mxu0 0.0
        %388 = vmatpush1.msra.mxu0 %v357
        %389 = vmatprep.subr.mxu0 0.0
        %390 = vmatpush1.msra.mxu0 %v339
        %391 = vmatprep.subr.mxu0 0.0
        %392 = vmatpush2.msra.mxu0 0.0
        %393 = vmatprep.subr.mxu0 0.0
        %394 = vmatpush2.msra.mxu0 0.0
        %395 = vmatprep.subr.mxu0 0.0
        %396 = vmatpush2.msra.mxu0 0.0
        %397 = vmatprep.subr.mxu0 0.0
        %398 = vmatpush2.msra.mxu0 0.0
        %399 = vmatprep.subr.mxu0 0.0
        %400 = vmatpush2.msra.mxu0 0.0
        %401 = vmatprep.subr.mxu0 0.0
        %402 = vmatpush2.msra.mxu0 0.0
        %403 = vmatprep.subr.mxu0 0.0
        %404 = vmatpush2.msra.mxu0 0.0
        %405 = vmatprep.subr.mxu0 0.0
        %406 = vmatpush2.msra.mxu0 0.0
        %407 = vmatprep.subr.mxu0 0.0
        %408 = vmatpush2.msra.mxu0 0.0
        %409 = vmatprep.subr.mxu0 0.0
        %410 = vmatpush2.msra.mxu0 0.0
        %411 = vmatprep.subr.mxu0 0.0
        %412 = vmatpush2.msra.mxu0 0.0
        %413 = vmatprep.subr.mxu0 0.0
        %414 = vmatpush2.msra.mxu0 0.0
        %415 = vmatprep.subr.mxu0 0.0
        %416 = vmatpush2.msra.mxu0 0.0
        %417 = vmatprep.subr.mxu0 0.0
        %418 = vmatpush2.msra.mxu0 0.0
        %419 = vmatprep.subr.mxu0 0.0
        %420 = vmatpush2.msra.mxu0 0.0
        %421 = vmatprep.subr.mxu0 0.0
        %422 = vmatpush2.msra.mxu0 0.0
        %423 = vmatprep.mubr.f32.mxu0 0.0
        %424 = vmatmul.mubr.f32.gmra.mxu0 %v350
        %v425 = vpop.f32.mrf.mxu0
        %v426 = vadd.f32 %v346, %v425
        %v427 = vpop.f32.mrf.mxu0
        %428 = vmatprep.mubr.f32.mxu0 0.0
        %429 = vmatmul.mubr.f32.gmra.mxu0 %v353
        %v430 = vpop.f32.mrf.mxu0
        %v431 = vadd.f32 %v346, %v430
        %v432 = vpop.f32.mrf.mxu0
        %433 = vdwg.mxu0
        %v434 = vtanh.pop %v426
        %v435 = vtanh.pop %v431
        %v436 = vld [vmem:[%s3] sm:$0xff]
        %v437 = vld [vmem:[%s3 + $0x8] sm:$0xff]
        %v438 = vld [vmem:[%s3 + $0x10] sm:$0xff]
        %v439 = vld [vmem:[%s3 + $0x18] sm:$0xff]
        %v440 = vld [vmem:[%s4] sm:$0x1]
        %441 = vset.pattern.permute.xlu0 8
        %442 = vperm.xlu0 %441, %v337
        %v443 = vpop.permute.xlu0 %442
        %445 = vset.pattern.permute.xlu0 8
        %446 = vperm.xlu0 %445, %v338
        %v447 = vpop.permute.xlu0 %446
        %v449 = vlaneseq
        %v450 = vshrl.u32 %v449, 7
        %v451 = vsub.s32 0, %v450
        %v452 = vrot.slane %v440, %v451
        %v453 = vmul.f32 %v443, %v452
        %v454 = vmul.f32 %v447, %v452
        %vm455 = vcmask 261120
        %v457 = vsel %vm455, %v434, 0
        %v460 = vsel %vm455, %v435, 0
        %462 = vmatprep.subr.mxu0 0.0
        %463 = vmatpush1.msra.mxu0 0.0
        %464 = vmatprep.subr.mxu0 0.0
        %465 = vmatpush1.msra.mxu0 0.0
        %466 = vmatprep.subr.mxu0 0.0
        %467 = vmatpush1.msra.mxu0 0.0
        %468 = vmatprep.subr.mxu0 0.0
        %469 = vmatpush1.msra.mxu0 0.0
        %470 = vmatprep.subr.mxu0 0.0
        %471 = vmatpush1.msra.mxu0 0.0
        %472 = vmatprep.subr.mxu0 0.0
        %473 = vmatpush1.msra.mxu0 0.0
        %474 = vmatprep.subr.mxu0 0.0
        %475 = vmatpush1.msra.mxu0 0.0
        %476 = vmatprep.subr.mxu0 0.0
        %477 = vmatpush1.msra.mxu0 0.0
        %478 = vmatprep.subr.mxu0 0.0
        %479 = vmatpush1.msra.mxu0 0.0
        %480 = vmatprep.subr.mxu0 0.0
        %481 = vmatpush1.msra.mxu0 0.0
        %482 = vmatprep.subr.mxu0 0.0
        %483 = vmatpush1.msra.mxu0 0.0
        %484 = vmatprep.subr.mxu0 0.0
        %485 = vmatpush1.msra.mxu0 0.0
        %486 = vmatprep.subr.mxu0 0.0
        %487 = vmatpush1.msra.mxu0 %v439
        %488 = vmatprep.subr.mxu0 0.0
        %489 = vmatpush1.msra.mxu0 %v438
        %490 = vmatprep.subr.mxu0 0.0
        %491 = vmatpush1.msra.mxu0 %v437
        %492 = vmatprep.subr.mxu0 0.0
        %493 = vmatpush1.msra.mxu0 %v436
        %494 = vmatprep.subr.mxu0 0.0
        %495 = vmatpush2.msra.mxu0 0.0
        %496 = vmatprep.subr.mxu0 0.0
        %497 = vmatpush2.msra.mxu0 0.0
        %498 = vmatprep.subr.mxu0 0.0
        %499 = vmatpush2.msra.mxu0 0.0
        %500 = vmatprep.subr.mxu0 0.0
        %501 = vmatpush2.msra.mxu0 0.0
        %502 = vmatprep.subr.mxu0 0.0
        %503 = vmatpush2.msra.mxu0 0.0
        %504 = vmatprep.subr.mxu0 0.0
        %505 = vmatpush2.msra.mxu0 0.0
        %506 = vmatprep.subr.mxu0 0.0
        %507 = vmatpush2.msra.mxu0 0.0
        %508 = vmatprep.subr.mxu0 0.0
        %509 = vmatpush2.msra.mxu0 0.0
        %510 = vmatprep.subr.mxu0 0.0
        %511 = vmatpush2.msra.mxu0 0.0
        %512 = vmatprep.subr.mxu0 0.0
        %513 = vmatpush2.msra.mxu0 0.0
        %514 = vmatprep.subr.mxu0 0.0
        %515 = vmatpush2.msra.mxu0 0.0
        %516 = vmatprep.subr.mxu0 0.0
        %517 = vmatpush2.msra.mxu0 0.0
        %518 = vmatprep.subr.mxu0 0.0
        %519 = vmatpush2.msra.mxu0 0.0
        %520 = vmatprep.subr.mxu0 0.0
        %521 = vmatpush2.msra.mxu0 0.0
        %522 = vmatprep.subr.mxu0 0.0
        %523 = vmatpush2.msra.mxu0 0.0
        %524 = vmatprep.subr.mxu0 0.0
        %525 = vmatpush2.msra.mxu0 0.0
        %526 = vmatprep.mubr.f32.mxu0 0.0
        %527 = vmatmul.mubr.f32.gmra.mxu0 %v457
        %v528 = vpop.f32.mrf.mxu0
        %v529 = vadd.f32 %v453, %v528
        %v530 = vpop.f32.mrf.mxu0
        %531 = vmatprep.mubr.f32.mxu0 0.0
        %532 = vmatmul.mubr.f32.gmra.mxu0 %v460
        %v533 = vpop.f32.mrf.mxu0
        %v534 = vadd.f32 %v454, %v533
        %v535 = vpop.f32.mrf.mxu0
        %536 = vdwg.mxu0
        %v537 = vld [vmem:[%s4 + $0x1] sm:$0x1]
        %v538 = vlaneseq
        %v539 = vshrl.u32 %v538, 7
        %v540 = vsub.s32 0, %v539
        %v541 = vrot.slane %v537, %v540
        %v542 = vadd.f32 %v529, %v541
        %v543 = vadd.f32 %v534, %v541
        %v544 = vtanh.pop %v542
        %v545 = vtanh.pop %v543
        %v546 = vld [vmem:[#allocation3] sm:$0xff]
        %v547 = vld [vmem:[#allocation3 + $0x8] sm:$0xff]
        %v548 = vld [vmem:[#allocation3 + $0x10] sm:$0xff]
        %v549 = vld [vmem:[#allocation3 + $0x18] sm:$0xff]
        %v550 = vld [vmem:[#allocation3 + $0x20] sm:$0xff]
        %v551 = vld [vmem:[#allocation3 + $0x28] sm:$0xff]
        %v552 = vld [vmem:[#allocation3 + $0x30] sm:$0xff]
        %v553 = vld [vmem:[#allocation3 + $0x38] sm:$0xff]
        %v554 = vld [vmem:[%s6] sm:$0x1]
        %v555 = vlaneseq
        %v556 = vshrl.u32 %v555, 7
        %v557 = vsub.s32 0, %v556
        %v558 = vrot.slane %v554, %v557
        %v559 = vmul.f32 %v443, %v558
        %v560 = vmul.f32 %v447, %v558
        %vm561 = vcmask 523264
        %v563 = vsel %vm561, %v544, 0
        %v566 = vsel %vm561, %v545, 0
        %568 = vmatprep.subr.mxu0 0.0
        %569 = vmatpush1.msra.mxu0 0.0
        %570 = vmatprep.subr.mxu0 0.0
        %571 = vmatpush1.msra.mxu0 0.0
        %572 = vmatprep.subr.mxu0 0.0
        %573 = vmatpush1.msra.mxu0 0.0
        %574 = vmatprep.subr.mxu0 0.0
        %575 = vmatpush1.msra.mxu0 0.0
        %576 = vmatprep.subr.mxu0 0.0
        %577 = vmatpush1.msra.mxu0 0.0
        %578 = vmatprep.subr.mxu0 0.0
        %579 = vmatpush1.msra.mxu0 0.0
        %580 = vmatprep.subr.mxu0 0.0
        %581 = vmatpush1.msra.mxu0 0.0
        %582 = vmatprep.subr.mxu0 0.0
        %583 = vmatpush1.msra.mxu0 0.0
        %584 = vmatprep.subr.mxu0 0.0
        %585 = vmatpush1.msra.mxu0 %v553
        %586 = vmatprep.subr.mxu0 0.0
        %587 = vmatpush1.msra.mxu0 %v552
        %588 = vmatprep.subr.mxu0 0.0
        %589 = vmatpush1.msra.mxu0 %v551
        %590 = vmatprep.subr.mxu0 0.0
        %591 = vmatpush1.msra.mxu0 %v550
        %592 = vmatprep.subr.mxu0 0.0
        %593 = vmatpush1.msra.mxu0 %v549
        %594 = vmatprep.subr.mxu0 0.0
        %595 = vmatpush1.msra.mxu0 %v548
        %596 = vmatprep.subr.mxu0 0.0
        %597 = vmatpush1.msra.mxu0 %v547
        %598 = vmatprep.subr.mxu0 0.0
        %599 = vmatpush1.msra.mxu0 %v546
        %600 = vmatprep.subr.mxu0 0.0
        %601 = vmatpush2.msra.mxu0 0.0
        %602 = vmatprep.subr.mxu0 0.0
        %603 = vmatpush2.msra.mxu0 0.0
        %604 = vmatprep.subr.mxu0 0.0
        %605 = vmatpush2.msra.mxu0 0.0
        %606 = vmatprep.subr.mxu0 0.0
        %607 = vmatpush2.msra.mxu0 0.0
        %608 = vmatprep.subr.mxu0 0.0
        %609 = vmatpush2.msra.mxu0 0.0
        %610 = vmatprep.subr.mxu0 0.0
        %611 = vmatpush2.msra.mxu0 0.0
        %612 = vmatprep.subr.mxu0 0.0
        %613 = vmatpush2.msra.mxu0 0.0
        %614 = vmatprep.subr.mxu0 0.0
        %615 = vmatpush2.msra.mxu0 0.0
        %616 = vmatprep.subr.mxu0 0.0
        %617 = vmatpush2.msra.mxu0 0.0
        %618 = vmatprep.subr.mxu0 0.0
        %619 = vmatpush2.msra.mxu0 0.0
        %620 = vmatprep.subr.mxu0 0.0
        %621 = vmatpush2.msra.mxu0 0.0
        %622 = vmatprep.subr.mxu0 0.0
        %623 = vmatpush2.msra.mxu0 0.0
        %624 = vmatprep.subr.mxu0 0.0
        %625 = vmatpush2.msra.mxu0 0.0
        %626 = vmatprep.subr.mxu0 0.0
        %627 = vmatpush2.msra.mxu0 0.0
        %628 = vmatprep.subr.mxu0 0.0
        %629 = vmatpush2.msra.mxu0 0.0
        %630 = vmatprep.subr.mxu0 0.0
        %631 = vmatpush2.msra.mxu0 0.0
        %632 = vmatprep.mubr.f32.mxu0 0.0
        %633 = vmatmul.mubr.f32.gmra.mxu0 %v563
        %v634 = vpop.f32.mrf.mxu0
        %v635 = vadd.f32 %v559, %v634
        %v636 = vpop.f32.mrf.mxu0
        %637 = vmatprep.mubr.f32.mxu0 0.0
        %638 = vmatmul.mubr.f32.gmra.mxu0 %v566
        %v639 = vpop.f32.mrf.mxu0
        %v640 = vadd.f32 %v560, %v639
        %v641 = vpop.f32.mrf.mxu0
        %642 = vdwg.mxu0
        %v643 = vld [vmem:[%s6 + $0x1] sm:$0x1]
        %v644 = vlaneseq
        %v645 = vshrl.u32 %v644, 7
        %v646 = vsub.s32 0, %v645
        %v647 = vrot.slane %v643, %v646
        %v648 = vadd.f32 %v635, %v647
        %v649 = vadd.f32 %v640, %v647
        %v650 = vtanh.pop %v648
        %v651 = vtanh.pop %v649
        %652 = vst.msk [vmem:[#allocation2] sm:$0xff] %vm561, %v650
        %653 = vst.msk [vmem:[#allocation2 + $0x8] sm:$0xff] %vm561, %v651
        %v654 = vld [vmem:[#allocation6] sm:$0xff]
        %v655 = vld [vmem:[#allocation6 + $0x8] sm:$0xff]
        %v656 = vld [vmem:[#allocation6 + $0x10] sm:$0xff]
        %v657 = vld [vmem:[#allocation6 + $0x18] sm:$0xff]
        %v658 = vld [vmem:[#allocation2] sm:$0xff]
        %v659 = vld [vmem:[#allocation2 + $0x8] sm:$0xff]
        %vm660 = vcmask 130048
        %v662 = vsel %vm660, %v658, 0
        %v665 = vsel %vm660, %v659, 0
        %667 = vmatprep.subr.mxu0 0.0
        %668 = vmatpush1.msra.mxu0 0.0
        %669 = vmatprep.subr.mxu0 0.0
        %670 = vmatpush1.msra.mxu0 0.0
        %671 = vmatprep.subr.mxu0 0.0
        %672 = vmatpush1.msra.mxu0 0.0
        %673 = vmatprep.subr.mxu0 0.0
        %674 = vmatpush1.msra.mxu0 0.0
        %675 = vmatprep.subr.mxu0 0.0
        %676 = vmatpush1.msra.mxu0 0.0
        %677 = vmatprep.subr.mxu0 0.0
        %678 = vmatpush1.msra.mxu0 0.0
        %679 = vmatprep.subr.mxu0 0.0
        %680 = vmatpush1.msra.mxu0 0.0
        %681 = vmatprep.subr.mxu0 0.0
        %682 = vmatpush1.msra.mxu0 0.0
        %683 = vmatprep.subr.mxu0 0.0
        %684 = vmatpush1.msra.mxu0 0.0
        %685 = vmatprep.subr.mxu0 0.0
        %686 = vmatpush1.msra.mxu0 0.0
        %687 = vmatprep.subr.mxu0 0.0
        %688 = vmatpush1.msra.mxu0 0.0
        %689 = vmatprep.subr.mxu0 0.0
        %690 = vmatpush1.msra.mxu0 0.0
        %691 = vmatprep.subr.mxu0 0.0
        %692 = vmatpush1.msra.mxu0 0.0
        %693 = vmatprep.subr.mxu0 0.0
        %694 = vmatpush1.msra.mxu0 0.0
        %695 = vmatprep.subr.mxu0 %v657
        %696 = vmatpush1.msra.mxu0 %v656
        %697 = vmatprep.subr.mxu0 %v655
        %698 = vmatpush1.msra.mxu0 %v654
        %699 = vmatprep.subr.mxu0 0.0
        %700 = vmatpush2.msra.mxu0 0.0
        %701 = vmatprep.subr.mxu0 0.0
        %702 = vmatpush2.msra.mxu0 0.0
        %703 = vmatprep.subr.mxu0 0.0
        %704 = vmatpush2.msra.mxu0 0.0
        %705 = vmatprep.subr.mxu0 0.0
        %706 = vmatpush2.msra.mxu0 0.0
        %707 = vmatprep.subr.mxu0 0.0
        %708 = vmatpush2.msra.mxu0 0.0
        %709 = vmatprep.subr.mxu0 0.0
        %710 = vmatpush2.msra.mxu0 0.0
        %711 = vmatprep.subr.mxu0 0.0
        %712 = vmatpush2.msra.mxu0 0.0
        %713 = vmatprep.subr.mxu0 0.0
        %714 = vmatpush2.msra.mxu0 0.0
        %715 = vmatprep.subr.mxu0 0.0
        %716 = vmatpush2.msra.mxu0 0.0
        %717 = vmatprep.subr.mxu0 0.0
        %718 = vmatpush2.msra.mxu0 0.0
        %719 = vmatprep.subr.mxu0 0.0
        %720 = vmatpush2.msra.mxu0 0.0
        %721 = vmatprep.subr.mxu0 0.0
        %722 = vmatpush2.msra.mxu0 0.0
        %723 = vmatprep.subr.mxu0 0.0
        %724 = vmatpush2.msra.mxu0 0.0
        %725 = vmatprep.subr.mxu0 0.0
        %726 = vmatpush2.msra.mxu0 0.0
        %727 = vmatprep.subr.mxu0 0.0
        %728 = vmatpush2.msra.mxu0 0.0
        %729 = vmatprep.subr.mxu0 0.0
        %730 = vmatpush2.msra.mxu0 0.0
        %731 = vmatprep.mubr.f32.mxu0 0.0
        %732 = vmatmul.mubr.f32.gmra.mxu0 %v662
        %v733 = vpop.f32.mrf.mxu0
        %v734 = vadd.f32 0.0, %v733
        %v735 = vpop.f32.mrf.mxu0
        %v736 = vadd.f32 0.0, %v735
        %737 = vmatprep.mubr.f32.mxu0 0.0
        %738 = vmatmul.mubr.f32.gmra.mxu0 %v665
        %v739 = vpop.f32.mrf.mxu0
        %v740 = vadd.f32 0.0, %v739
        %v741 = vpop.f32.mrf.mxu0
        %v742 = vadd.f32 0.0, %v741
        %743 = vdwg.mxu0
        %744 = vrot.lane.b32.xlu0 %v658, 16
        %v745 = vpop.permute.xlu0 %744
        %746 = vrot.lane.b32.xlu0 %v659, 16
        %v747 = vpop.permute.xlu0 %746
        %750 = vrot.lane.b32.xlu0 %v658, 32
        %v751 = vpop.permute.xlu0 %750
        %752 = vrot.lane.b32.xlu0 %v659, 32
        %v753 = vpop.permute.xlu0 %752
        %756 = vrot.lane.b32.xlu0 %v658, 48
        %v757 = vpop.permute.xlu0 %756
        %758 = vrot.lane.b32.xlu0 %v659, 48
        %v759 = vpop.permute.xlu0 %758
        %762 = vrot.lane.b32.xlu0 %v658, 64
        %v763 = vpop.permute.xlu0 %762
        %764 = vrot.lane.b32.xlu0 %v659, 64
        %v765 = vpop.permute.xlu0 %764
        %768 = vrot.lane.b32.xlu0 %v658, 80
        %v769 = vpop.permute.xlu0 %768
        %770 = vrot.lane.b32.xlu0 %v659, 80
        %v771 = vpop.permute.xlu0 %770
        %774 = vrot.lane.b32.xlu0 %v658, 96
        %v775 = vpop.permute.xlu0 %774
        %776 = vrot.lane.b32.xlu0 %v659, 96
        %v777 = vpop.permute.xlu0 %776
        %780 = vrot.lane.b32.xlu0 %v658, 112
        %v781 = vpop.permute.xlu0 %780
        %782 = vrot.lane.b32.xlu0 %v659, 112
        %v783 = vpop.permute.xlu0 %782
        %v786 = vsel %vm660, %v658, %v745
        %v787 = vsel %vm660, %v659, %v747
        %v788 = vsel %vm455, %v786, %v751
        %v789 = vsel %vm455, %v787, %v753
        %vm790 = vcmask 392192
        %v791 = vsel %vm790, %v788, %v757
        %v792 = vsel %vm790, %v789, %v759
        %v793 = vsel %vm561, %v791, %v763
        %v794 = vsel %vm561, %v792, %v765
        %vm795 = vcmask 654336
        %v796 = vsel %vm795, %v793, %v769
        %v797 = vsel %vm795, %v794, %v771
        %vm798 = vcmask 785408
        %v799 = vsel %vm798, %v796, %v775
        %v800 = vsel %vm798, %v797, %v777
        %vm801 = vcmask 916480
        %v802 = vsel %vm801, %v799, %v781
        %v803 = vsel %vm801, %v800, %v783
        %v804 = vmul.f32 %v734, %v802
        %v805 = vmul.f32 %v736, %v802
        %v806 = vmul.f32 %v740, %v803
        %v807 = vmul.f32 %v742, %v803
        %v808 = vsel %vm660, %v781, 0
        %v810 = vsel %vm660, %v783, 0
        %812 = vmatprep.subr.mxu0 0.0
        %813 = vmatpush1.msra.mxu0 0.0
        %814 = vmatprep.subr.mxu0 0.0
        %815 = vmatpush1.msra.mxu0 0.0
        %816 = vmatprep.subr.mxu0 0.0
        %817 = vmatpush1.msra.mxu0 0.0
        %818 = vmatprep.subr.mxu0 0.0
        %819 = vmatpush1.msra.mxu0 0.0
        %820 = vmatprep.subr.mxu0 0.0
        %821 = vmatpush1.msra.mxu0 0.0
        %822 = vmatprep.subr.mxu0 0.0
        %823 = vmatpush1.msra.mxu0 0.0
        %824 = vmatprep.subr.mxu0 0.0
        %825 = vmatpush1.msra.mxu0 0.0
        %826 = vmatprep.subr.mxu0 0.0
        %827 = vmatpush1.msra.mxu0 0.0
        %828 = vmatprep.subr.mxu0 0.0
        %829 = vmatpush1.msra.mxu0 0.0
        %830 = vmatprep.subr.mxu0 0.0
        %831 = vmatpush1.msra.mxu0 0.0
        %832 = vmatprep.subr.mxu0 0.0
        %833 = vmatpush1.msra.mxu0 0.0
        %834 = vmatprep.subr.mxu0 0.0
        %835 = vmatpush1.msra.mxu0 0.0
        %836 = vmatprep.subr.mxu0 0.0
        %837 = vmatpush1.msra.mxu0 0.0
        %838 = vmatprep.subr.mxu0 0.0
        %839 = vmatpush1.msra.mxu0 0.0
        %840 = vmatprep.subr.mxu0 %v657
        %841 = vmatpush1.msra.mxu0 %v656
        %842 = vmatprep.subr.mxu0 %v655
        %843 = vmatpush1.msra.mxu0 %v654
        %844 = vmatprep.subr.mxu0 0.0
        %845 = vmatpush2.msra.mxu0 0.0
        %846 = vmatprep.subr.mxu0 0.0
        %847 = vmatpush2.msra.mxu0 0.0
        %848 = vmatprep.subr.mxu0 0.0
        %849 = vmatpush2.msra.mxu0 0.0
        %850 = vmatprep.subr.mxu0 0.0
        %851 = vmatpush2.msra.mxu0 0.0
        %852 = vmatprep.subr.mxu0 0.0
        %853 = vmatpush2.msra.mxu0 0.0
        %854 = vmatprep.subr.mxu0 0.0
        %855 = vmatpush2.msra.mxu0 0.0
        %856 = vmatprep.subr.mxu0 0.0
        %857 = vmatpush2.msra.mxu0 0.0
        %858 = vmatprep.subr.mxu0 0.0
        %859 = vmatpush2.msra.mxu0 0.0
        %860 = vmatprep.subr.mxu0 0.0
        %861 = vmatpush2.msra.mxu0 0.0
        %862 = vmatprep.subr.mxu0 0.0
        %863 = vmatpush2.msra.mxu0 0.0
        %864 = vmatprep.subr.mxu0 0.0
        %865 = vmatpush2.msra.mxu0 0.0
        %866 = vmatprep.subr.mxu0 0.0
        %867 = vmatpush2.msra.mxu0 0.0
        %868 = vmatprep.subr.mxu0 0.0
        %869 = vmatpush2.msra.mxu0 0.0
        %870 = vmatprep.subr.mxu0 0.0
        %871 = vmatpush2.msra.mxu0 0.0
        %872 = vmatprep.subr.mxu0 0.0
        %873 = vmatpush2.msra.mxu0 0.0
        %874 = vmatprep.subr.mxu0 0.0
        %875 = vmatpush2.msra.mxu0 0.0
        %876 = vmatprep.mubr.f32.mxu0 0.0
        %877 = vmatmul.mubr.f32.gmra.mxu0 %v808
        %v878 = vpop.f32.mrf.mxu0
        %v879 = vadd.f32 0.0, %v878
        %v880 = vpop.f32.mrf.mxu0
        %v881 = vadd.f32 0.0, %v880
        %882 = vmatprep.mubr.f32.mxu0 0.0
        %883 = vmatmul.mubr.f32.gmra.mxu0 %v810
        %v884 = vpop.f32.mrf.mxu0
        %v885 = vadd.f32 0.0, %v884
        %v886 = vpop.f32.mrf.mxu0
        %v887 = vadd.f32 0.0, %v886
        %888 = vdwg.mxu0
        %v889 = vsel %vm660, %v781, %v658
        %v890 = vsel %vm660, %v783, %v659
        %v891 = vsel %vm455, %v889, %v745
        %v892 = vsel %vm455, %v890, %v747
        %v893 = vsel %vm790, %v891, %v751
        %v894 = vsel %vm790, %v892, %v753
        %v895 = vsel %vm561, %v893, %v757
        %v896 = vsel %vm561, %v894, %v759
        %v897 = vsel %vm795, %v895, %v763
        %v898 = vsel %vm795, %v896, %v765
        %v899 = vsel %vm798, %v897, %v769
        %v900 = vsel %vm798, %v898, %v771
        %v901 = vsel %vm801, %v899, %v775
        %v902 = vsel %vm801, %v900, %v777
        %v903 = vmul.f32 %v879, %v901
        %v904 = vmul.f32 %v881, %v901
        %v905 = vmul.f32 %v885, %v902
        %v906 = vmul.f32 %v887, %v902
        %v907 = vadd.f32 %v804, %v903
        %v908 = vadd.f32 %v805, %v904
        %v909 = vadd.f32 %v806, %v905
        %v910 = vadd.f32 %v807, %v906
        %v911 = vsel %vm660, %v775, 0
        %v913 = vsel %vm660, %v777, 0
        %915 = vmatprep.subr.mxu0 0.0
        %916 = vmatpush1.msra.mxu0 0.0
        %917 = vmatprep.subr.mxu0 0.0
        %918 = vmatpush1.msra.mxu0 0.0
        %919 = vmatprep.subr.mxu0 0.0
        %920 = vmatpush1.msra.mxu0 0.0
        %921 = vmatprep.subr.mxu0 0.0
        %922 = vmatpush1.msra.mxu0 0.0
        %923 = vmatprep.subr.mxu0 0.0
        %924 = vmatpush1.msra.mxu0 0.0
        %925 = vmatprep.subr.mxu0 0.0
        %926 = vmatpush1.msra.mxu0 0.0
        %927 = vmatprep.subr.mxu0 0.0
        %928 = vmatpush1.msra.mxu0 0.0
        %929 = vmatprep.subr.mxu0 0.0
        %930 = vmatpush1.msra.mxu0 0.0
        %931 = vmatprep.subr.mxu0 0.0
        %932 = vmatpush1.msra.mxu0 0.0
        %933 = vmatprep.subr.mxu0 0.0
        %934 = vmatpush1.msra.mxu0 0.0
        %935 = vmatprep.subr.mxu0 0.0
        %936 = vmatpush1.msra.mxu0 0.0
        %937 = vmatprep.subr.mxu0 0.0
        %938 = vmatpush1.msra.mxu0 0.0
        %939 = vmatprep.subr.mxu0 0.0
        %940 = vmatpush1.msra.mxu0 0.0
        %941 = vmatprep.subr.mxu0 0.0
        %942 = vmatpush1.msra.mxu0 0.0
        %943 = vmatprep.subr.mxu0 %v657
        %944 = vmatpush1.msra.mxu0 %v656
        %945 = vmatprep.subr.mxu0 %v655
        %946 = vmatpush1.msra.mxu0 %v654
        %947 = vmatprep.subr.mxu0 0.0
        %948 = vmatpush2.msra.mxu0 0.0
        %949 = vmatprep.subr.mxu0 0.0
        %950 = vmatpush2.msra.mxu0 0.0
        %951 = vmatprep.subr.mxu0 0.0
        %952 = vmatpush2.msra.mxu0 0.0
        %953 = vmatprep.subr.mxu0 0.0
        %954 = vmatpush2.msra.mxu0 0.0
        %955 = vmatprep.subr.mxu0 0.0
        %956 = vmatpush2.msra.mxu0 0.0
        %957 = vmatprep.subr.mxu0 0.0
        %958 = vmatpush2.msra.mxu0 0.0
        %959 = vmatprep.subr.mxu0 0.0
        %960 = vmatpush2.msra.mxu0 0.0
        %961 = vmatprep.subr.mxu0 0.0
        %962 = vmatpush2.msra.mxu0 0.0
        %963 = vmatprep.subr.mxu0 0.0
        %964 = vmatpush2.msra.mxu0 0.0
        %965 = vmatprep.subr.mxu0 0.0
        %966 = vmatpush2.msra.mxu0 0.0
        %967 = vmatprep.subr.mxu0 0.0
        %968 = vmatpush2.msra.mxu0 0.0
        %969 = vmatprep.subr.mxu0 0.0
        %970 = vmatpush2.msra.mxu0 0.0
        %971 = vmatprep.subr.mxu0 0.0
        %972 = vmatpush2.msra.mxu0 0.0
        %973 = vmatprep.subr.mxu0 0.0
        %974 = vmatpush2.msra.mxu0 0.0
        %975 = vmatprep.subr.mxu0 0.0
        %976 = vmatpush2.msra.mxu0 0.0
        %977 = vmatprep.subr.mxu0 0.0
        %978 = vmatpush2.msra.mxu0 0.0
        %979 = vmatprep.mubr.f32.mxu0 0.0
        %980 = vmatmul.mubr.f32.gmra.mxu0 %v911
        %v981 = vpop.f32.mrf.mxu0
        %v982 = vadd.f32 0.0, %v981
        %v983 = vpop.f32.mrf.mxu0
        %v984 = vadd.f32 0.0, %v983
        %985 = vmatprep.mubr.f32.mxu0 0.0
        %986 = vmatmul.mubr.f32.gmra.mxu0 %v913
        %v987 = vpop.f32.mrf.mxu0
        %v988 = vadd.f32 0.0, %v987
        %v989 = vpop.f32.mrf.mxu0
        %v990 = vadd.f32 0.0, %v989
        %991 = vdwg.mxu0
        %v992 = vsel %vm660, %v775, %v781
        %v993 = vsel %vm660, %v777, %v783
        %v994 = vsel %vm455, %v992, %v658
        %v995 = vsel %vm455, %v993, %v659
        %v996 = vsel %vm790, %v994, %v745
        %v997 = vsel %vm790, %v995, %v747
        %v998 = vsel %vm561, %v996, %v751
        %v999 = vsel %vm561, %v997, %v753
        %v1000 = vsel %vm795, %v998, %v757
        %v1001 = vsel %vm795, %v999, %v759
        %v1002 = vsel %vm798, %v1000, %v763
        %v1003 = vsel %vm798, %v1001, %v765
        %v1004 = vsel %vm801, %v1002, %v769
        %v1005 = vsel %vm801, %v1003, %v771
        %v1006 = vmul.f32 %v982, %v1004
        %v1007 = vmul.f32 %v984, %v1004
        %v1008 = vmul.f32 %v988, %v1005
        %v1009 = vmul.f32 %v990, %v1005
        %v1010 = vadd.f32 %v907, %v1006
        %v1011 = vadd.f32 %v908, %v1007
        %v1012 = vadd.f32 %v909, %v1008
        %v1013 = vadd.f32 %v910, %v1009
        %v1014 = vsel %vm660, %v769, 0
        %v1016 = vsel %vm660, %v771, 0
        %1018 = vmatprep.subr.mxu0 0.0
        %1019 = vmatpush1.msra.mxu0 0.0
        %1020 = vmatprep.subr.mxu0 0.0
        %1021 = vmatpush1.msra.mxu0 0.0
        %1022 = vmatprep.subr.mxu0 0.0
        %1023 = vmatpush1.msra.mxu0 0.0
        %1024 = vmatprep.subr.mxu0 0.0
        %1025 = vmatpush1.msra.mxu0 0.0
        %1026 = vmatprep.subr.mxu0 0.0
        %1027 = vmatpush1.msra.mxu0 0.0
        %1028 = vmatprep.subr.mxu0 0.0
        %1029 = vmatpush1.msra.mxu0 0.0
        %1030 = vmatprep.subr.mxu0 0.0
        %1031 = vmatpush1.msra.mxu0 0.0
        %1032 = vmatprep.subr.mxu0 0.0
        %1033 = vmatpush1.msra.mxu0 0.0
        %1034 = vmatprep.subr.mxu0 0.0
        %1035 = vmatpush1.msra.mxu0 0.0
        %1036 = vmatprep.subr.mxu0 0.0
        %1037 = vmatpush1.msra.mxu0 0.0
        %1038 = vmatprep.subr.mxu0 0.0
        %1039 = vmatpush1.msra.mxu0 0.0
        %1040 = vmatprep.subr.mxu0 0.0
        %1041 = vmatpush1.msra.mxu0 0.0
        %1042 = vmatprep.subr.mxu0 0.0
        %1043 = vmatpush1.msra.mxu0 0.0
        %1044 = vmatprep.subr.mxu0 0.0
        %1045 = vmatpush1.msra.mxu0 0.0
        %1046 = vmatprep.subr.mxu0 %v657
        %1047 = vmatpush1.msra.mxu0 %v656
        %1048 = vmatprep.subr.mxu0 %v655
        %1049 = vmatpush1.msra.mxu0 %v654
        %1050 = vmatprep.subr.mxu0 0.0
        %1051 = vmatpush2.msra.mxu0 0.0
        %1052 = vmatprep.subr.mxu0 0.0
        %1053 = vmatpush2.msra.mxu0 0.0
        %1054 = vmatprep.subr.mxu0 0.0
        %1055 = vmatpush2.msra.mxu0 0.0
        %1056 = vmatprep.subr.mxu0 0.0
        %1057 = vmatpush2.msra.mxu0 0.0
        %1058 = vmatprep.subr.mxu0 0.0
        %1059 = vmatpush2.msra.mxu0 0.0
        %1060 = vmatprep.subr.mxu0 0.0
        %1061 = vmatpush2.msra.mxu0 0.0
        %1062 = vmatprep.subr.mxu0 0.0
        %1063 = vmatpush2.msra.mxu0 0.0
        %1064 = vmatprep.subr.mxu0 0.0
        %1065 = vmatpush2.msra.mxu0 0.0
        %1066 = vmatprep.subr.mxu0 0.0
        %1067 = vmatpush2.msra.mxu0 0.0
        %1068 = vmatprep.subr.mxu0 0.0
        %1069 = vmatpush2.msra.mxu0 0.0
        %1070 = vmatprep.subr.mxu0 0.0
        %1071 = vmatpush2.msra.mxu0 0.0
        %1072 = vmatprep.subr.mxu0 0.0
        %1073 = vmatpush2.msra.mxu0 0.0
        %1074 = vmatprep.subr.mxu0 0.0
        %1075 = vmatpush2.msra.mxu0 0.0
        %1076 = vmatprep.subr.mxu0 0.0
        %1077 = vmatpush2.msra.mxu0 0.0
        %1078 = vmatprep.subr.mxu0 0.0
        %1079 = vmatpush2.msra.mxu0 0.0
        %1080 = vmatprep.subr.mxu0 0.0
        %1081 = vmatpush2.msra.mxu0 0.0
        %1082 = vmatprep.mubr.f32.mxu0 0.0
        %1083 = vmatmul.mubr.f32.gmra.mxu0 %v1014
        %v1084 = vpop.f32.mrf.mxu0
        %v1085 = vadd.f32 0.0, %v1084
        %v1086 = vpop.f32.mrf.mxu0
        %v1087 = vadd.f32 0.0, %v1086
        %1088 = vmatprep.mubr.f32.mxu0 0.0
        %1089 = vmatmul.mubr.f32.gmra.mxu0 %v1016
        %v1090 = vpop.f32.mrf.mxu0
        %v1091 = vadd.f32 0.0, %v1090
        %v1092 = vpop.f32.mrf.mxu0
        %v1093 = vadd.f32 0.0, %v1092
        %1094 = vdwg.mxu0
        %v1095 = vsel %vm660, %v769, %v775
        %v1096 = vsel %vm660, %v771, %v777
        %v1097 = vsel %vm455, %v1095, %v781
        %v1098 = vsel %vm455, %v1096, %v783
        %v1099 = vsel %vm790, %v1097, %v658
        %v1100 = vsel %vm790, %v1098, %v659
        %v1101 = vsel %vm561, %v1099, %v745
        %v1102 = vsel %vm561, %v1100, %v747
        %v1103 = vsel %vm795, %v1101, %v751
        %v1104 = vsel %vm795, %v1102, %v753
        %v1105 = vsel %vm798, %v1103, %v757
        %v1106 = vsel %vm798, %v1104, %v759
        %v1107 = vsel %vm801, %v1105, %v763
        %v1108 = vsel %vm801, %v1106, %v765
        %v1109 = vmul.f32 %v1085, %v1107
        %v1110 = vmul.f32 %v1087, %v1107
        %v1111 = vmul.f32 %v1091, %v1108
        %v1112 = vmul.f32 %v1093, %v1108
        %v1113 = vadd.f32 %v1010, %v1109
        %v1114 = vadd.f32 %v1011, %v1110
        %v1115 = vadd.f32 %v1012, %v1111
        %v1116 = vadd.f32 %v1013, %v1112
        %v1117 = vxor.u32 %v1113, 2147483648
        %v1118 = vxor.u32 %v1114, 2147483648
        %v1119 = vxor.u32 %v1115, 2147483648
        %v1120 = vxor.u32 %v1116, 2147483648
        %v1121 = vmul.f32 %v1117, 1.442695
        %v1122 = vpow.pop %v1121
        %v1123 = vmul.f32 %v1118, 1.442695
        %v1124 = vpow.pop %v1123
        %v1125 = vmul.f32 %v1119, 1.442695
        %v1126 = vpow.pop %v1125
        %v1127 = vmul.f32 %v1120, 1.442695
        %v1128 = vpow.pop %v1127
        %v1129 = vadd.f32 %v1122, 1.0
        %v1130 = vadd.f32 %v1124, 1.0
        %v1131 = vadd.f32 %v1126, 1.0
        %v1132 = vadd.f32 %v1128, 1.0
        %v1133 = vrcp.pop %v1129
        %v1134 = vmul.f32 1.0, %v1133
        %v1135 = vrcp.pop %v1130
        %v1136 = vmul.f32 1.0, %v1135
        %v1137 = vrcp.pop %v1131
        %v1138 = vmul.f32 1.0, %v1137
        %v1139 = vrcp.pop %v1132
        %v1140 = vmul.f32 1.0, %v1139
        %s1141 = smul.u32 0, 2
        %s1142 = smul.addr %s1141, 8
        %s1143 = scalar_lea.vmem %s329, %s1142 [#allocation8]
        %1144 = vst [vmem:[%s1143] sm:$0xff] %v1134
        %1145 = vst [vmem:[%s1143 + $0x8] sm:$0xff] %v1136
        %1146 = vst [vmem:[%s1143 + $0x10] sm:$0xff] %v1138
        %1147 = vst [vmem:[%s1143 + $0x18] sm:$0xff] %v1140
        %s1148 = sand.u32 %s205, 1
        %s1149 = scalar_lea.sflag [#allocation5], %s1148
        %s1150 = sand.u32 %s205, 1
        %s1151 = smul.addr %s1150, 32
        %s1152 = scalar_lea.vmem [#allocation8], %s1151
        // Predicated region
        $region61: #{tpu_custom_call.1} parent=51 // pred_check
          %p1153 = pneg %p215
        $region62: #{tpu_custom_call.1} parent=51 // pred_check_branch
          %1155 = sbr.rel (%p1153) target = $region64
        $region63: #{tpu_custom_call.1} parent=51 // pred_region
          %s1156 = smul.u32 2, %s24
          %s1158 = ssub.s32 512, 512
          %1159 = vsyncadd %s1149, %s1158
          %s1160 = smul.addr %s1156, 2
          %s1161 = smul.addr %s1160, 128
          %s1162 = scalar_lea.hbm %s8, %s1161
          %s1163 = sshll.u32 %s1152, 4
          %s1164 = int_to_ptr.vmem [resolvable:$true] %s1163
          %1169 = dma.vmem_to_hbm [thread:$0]  %s1164, 512, %s1162, %s1149, 256, 256, 16
        $region64: #{tpu_custom_call.1} parent=51 // pred_fallthru
          _
      $region52: #{tpu_custom_call.1} parent=5 // pred_fallthru
        _
      %p1170 = scmp.le.s32.totalorder 2, %s19
      // Predicated region
      $region65: #{tpu_custom_call.1} parent=5 // pred_check
        %p1171 = pneg %p1170
      $region66: #{tpu_custom_call.1} parent=5 // pred_check_branch
        %1173 = sbr.rel (%p1171) target = $region68
      $region67: #{tpu_custom_call.1} parent=5 // pred_region
        %s1174 = ssub.s32 %s19, 2
        // Predicated region
        $region69: #{tpu_custom_call.1} parent=67 // pred_check
          %p1175 = pneg %p221
        $region70: #{tpu_custom_call.1} parent=67 // pred_check_branch
          %1177 = sbr.rel (%p1175) target = $region72
        $region71: #{tpu_custom_call.1} parent=67 // pred_region
          %s1178 = sand.u32 %s206, 1
          %s1179 = scalar_lea.sflag [#allocation5], %s1178
          %s1180 = sand.u32 %s206, 1
          %s1181 = smul.addr %s1180, 32
          %s1182 = scalar_lea.vmem [#allocation8], %s1181
          %1183 = dma.done %s1179, 512
        $region72: #{tpu_custom_call.1} parent=67 // pred_fallthru
          _
      $region68: #{tpu_custom_call.1} parent=5 // pred_fallthru
        _
    $region6: #{tpu_custom_call.1} parent=1 // loop_footer
      %s23 = sadd.s32 1, %s19
    $region7: #{tpu_custom_call.1} parent=1 // loop_footer_branch
      %18 = sbr.rel target = $region3
    $region8: #{tpu_custom_call.1} parent=1 // loop_exit
      _
    %1184 = vsyncpa [#allocation4], 1
    %s1185 = scalar_lea.sflag [#allocation4], 1
    %1186 = vsyncpa %s1185, 1
    %1187 = vsyncpa [#allocation7], 1
    %1188 = vsyncpa [#allocation5], 1
    %s1189 = scalar_lea.sflag [#allocation5], 1
    %1190 = vsyncpa %s1189, 1

</llo_original>
